<compile_context>
chip_gen: v5e
topology: v5e:2x2
jax: 0.10.0
libtpu: 0.0.40
codegen_flags: <defaults>
</compile_context>

<pallas_src>
import functools

import jax
import jax.numpy as jnp
from jax.experimental import pallas as pl
from jax.experimental.pallas import tpu as pltpu


def _ce_partial_kernel(x_ref, tgt_ref, out_ref, *, total_rows):
    """Per-tile partial of sum_b(-log_softmax(x)[b, target_b]).

    x_ref:   [TB, C] logits in native dtype (f32 or bf16)
    tgt_ref: [TB, 1] int32 class indices
    out_ref: [1, 8, 128] f32 — tile partial sum broadcast lane-dense
    """
    x = x_ref[...].astype(jnp.float32)                # cast in-kernel (v5e has no bf16 VPU/EUP)
    tgt = tgt_ref[...]                                # [TB, 1] int32
    tb, c = x.shape

    # Numerically stable per-row logsumexp.
    m = jnp.max(x, axis=1, keepdims=True)             # [TB, 1]
    lse = jnp.log(jnp.sum(jnp.exp(x - m), axis=1, keepdims=True))

    # x[b, target_b] via masked reduction — no one_hot / logp temporaries.
    class_ids = jax.lax.broadcasted_iota(jnp.int32, (tb, c), 1)
    x_tgt = jnp.sum(jnp.where(class_ids == tgt, x, 0.0), axis=1, keepdims=True)

    per_row = (m + lse) - x_tgt                       # == -log_softmax(x)[b, target_b]

    # Mask rows of the (possibly padded) final batch tile.
    row_ids = pl.program_id(0) * tb + jax.lax.broadcasted_iota(jnp.int32, (tb, 1), 0)
    per_row = jnp.where(row_ids < total_rows, per_row, 0.0)

    out_ref[...] = jnp.full(out_ref.shape, jnp.sum(per_row), dtype=jnp.float32)


def log_softmax_wrapper_loss(outputs, targets, *, block_batch=None):
    """Forward of LogSoftmaxWrapper(nn.Identity()).

    outputs: [B, 1, C] float (kept in native dtype for the DMA)
    targets: [B, 1] int
    Returns the scalar f32 loss (KLDiv(sum)/one_hot.sum() == mean CE).
    """
    B = outputs.shape[0]
    C = outputs.shape[-1]
    x = outputs.reshape(B, C)                         # NO f32 upcast here — bf16 stays bf16
    t = targets.reshape(B, 1).astype(jnp.int32)
    itemsize = jnp.dtype(x.dtype).itemsize

    if block_batch is None:
        # ~4 MiB per f32 working tile: with double-buffered inputs and the
        # in-kernel f32 copies this stays well under the 32 MiB scoped VMEM
        # limit on every generation (incl. v7x's 64 MiB physical VMEM).
        tile_budget_bytes = 4 * 1024 * 1024
        tb = tile_budget_bytes // max(1, C * 4)
        tb = max(8, min(1024, (tb // 8) * 8))
    else:
        tb = block_batch
    if B <= tb:
        tb = B                                        # full-dim block is always legal
    num_tiles = pl.cdiv(B, tb)

    kernel = functools.partial(_ce_partial_kernel, total_rows=B)

    cost = pl.CostEstimate(
        flops=5 * B * C,                              # max/sub/sum + masked target gather
        transcendentals=B * C,                        # exp
        bytes_accessed=B * C * itemsize + B * 4 + num_tiles * 8 * 128 * 4,
    )

    # TODO(synk): for very large C (>64k classes) also tile the class dim with
    # an online-softmax (running max / running sum) formulation.
    partials = pl.pallas_call(
        kernel,
        out_shape=jax.ShapeDtypeStruct((num_tiles, 8, 128), jnp.float32),
        grid=(num_tiles,),
        in_specs=[
            pl.BlockSpec((tb, C), lambda i: (i, 0)),
            pl.BlockSpec((tb, 1), lambda i: (i, 0)),
        ],
        out_specs=pl.BlockSpec((1, 8, 128), lambda i: (i, 0, 0)),
        compiler_params=pltpu.CompilerParams(
            dimension_semantics=("parallel",),        # v7x: shard batch tiles over 2 TCs
            vmem_limit_bytes=32 * 1024 * 1024,
        ),
        cost_estimate=cost,
    )(x, t)

    # one_hot.sum() == B for valid targets (F.one_hot would raise otherwise).
    return jnp.sum(partials[:, 0, 0]) / jnp.float32(B)


def _reference_loss(outputs, targets):
    """Pure-JAX reference mirroring the PyTorch module (loss_fn=Identity)."""
    B, _, C = outputs.shape
    x = outputs.reshape(B, C).astype(jnp.float32)
    t = targets.reshape(B)
    one_hot = jax.nn.one_hot(t, C, dtype=jnp.float32)
    logp = jax.nn.log_softmax(x, axis=1)
    return -jnp.sum(one_hot * logp) / jnp.sum(one_hot)


if __name__ == "__main__":
    key = jax.random.PRNGKey(0)
    k1, k2, k3, k4 = jax.random.split(key, 4)

    # TODO(synk): loss_fn is taken as Identity; AngularMargin variants would be
    # a small extra elementwise stage on (outputs, one_hot) before log_softmax.

    # Case 1: module-shaped small example, f32, single tile.
    B1, C1 = 8, 32
    outputs1 = jax.random.normal(k1, (B1, 1, C1), dtype=jnp.float32)
    targets1 = jax.random.randint(k2, (B1, 1), 0, C1, dtype=jnp.int32)
    loss1 = jax.block_until_ready(log_softmax_wrapper_loss(outputs1, targets1))
    ref1 = jax.block_until_ready(_reference_loss(outputs1, targets1))
    assert jnp.allclose(loss1, ref1, rtol=1e-5, atol=1e-5), (loss1, ref1)

    # Case 2: bf16 logits, multi-tile grid with a padded (masked) final tile.
    B2, C2 = 20, 40
    outputs2 = jax.random.normal(k3, (B2, 1, C2), dtype=jnp.float32).astype(jnp.bfloat16)
    targets2 = jax.random.randint(k4, (B2, 1), 0, C2, dtype=jnp.int32)
    loss2 = jax.block_until_ready(
        log_softmax_wrapper_loss(outputs2, targets2, block_batch=8))
    ref2 = jax.block_until_ready(_reference_loss(outputs2, targets2))
    assert jnp.allclose(loss2, ref2, rtol=1e-4, atol=1e-4), (loss2, ref2)

    print("KERNEL_OK")
</pallas_src>

<mosaic_0001>
module attributes {stable_mosaic.version = 11 : i64} {
  func.func @_ce_partial_kernel(%arg0: i32, %arg1: memref<8x32xf32, #tpu.memory_space<vmem>>, %arg2: memref<8x1xi32, #tpu.memory_space<vmem>>, %arg3: memref<1x8x128xf32, #tpu.memory_space<vmem>>) attributes {dimension_semantics = [#tpu.dimension_semantics<parallel>], iteration_bounds = array<i64: 1>, scalar_prefetch = 0 : i64, scratch_operands = 0 : i64, tpu.core_type = #tpu.core_type<tc>, window_params = [{transform_indices = @transform_0, window_bounds = array<i64: 8, 32>}, {transform_indices = @transform_1, window_bounds = array<i64: 8, 1>}, {transform_indices = @transform_2, window_bounds = array<i64: 1, 8, 128>}]} {
    %c0 = arith.constant 0 : index
    %c0_0 = arith.constant 0 : index
    %0 = vector.load %arg1[%c0, %c0_0] : memref<8x32xf32, #tpu.memory_space<vmem>>, vector<8x32xf32>
    %c0_1 = arith.constant 0 : index
    %c0_2 = arith.constant 0 : index
    %1 = vector.load %arg2[%c0_1, %c0_2] : memref<8x1xi32, #tpu.memory_space<vmem>>, vector<8x1xi32>
    %cst = arith.constant dense<0xFF800000> : vector<8xf32>
    %2 = vector.multi_reduction <maximumf>, %0, %cst [1] : vector<8x32xf32> to vector<8xf32>
    %3 = vector.shape_cast %2 : vector<8xf32> to vector<8x1xf32>
    %4 = vector.broadcast %3 : vector<8x1xf32> to vector<8x32xf32>
    %5 = arith.subf %0, %4 : vector<8x32xf32>
    %6 = math.exp %5 : vector<8x32xf32>
    %cst_3 = arith.constant dense<0.000000e+00> : vector<8xf32>
    %7 = vector.multi_reduction <add>, %6, %cst_3 [1] : vector<8x32xf32> to vector<8xf32>
    %8 = vector.shape_cast %7 : vector<8xf32> to vector<8x1xf32>
    %9 = math.log %8 : vector<8x1xf32>
    %10 = tpu.iota {dimensions = array<i32: 1>} : vector<8x32xi32>
    %11 = vector.broadcast %1 : vector<8x1xi32> to vector<8x32xi32>
    %12 = arith.cmpi eq, %10, %11 : vector<8x32xi32>
    %cst_4 = arith.constant 0.000000e+00 : f32
    %13 = vector.broadcast %cst_4 : f32 to vector<8x32xf32>
    %14 = arith.select %12, %0, %13 : vector<8x32xi1>, vector<8x32xf32>
    %cst_5 = arith.constant dense<0.000000e+00> : vector<8xf32>
    %15 = vector.multi_reduction <add>, %14, %cst_5 [1] : vector<8x32xf32> to vector<8xf32>
    %16 = vector.shape_cast %15 : vector<8xf32> to vector<8x1xf32>
    %17 = arith.addf %3, %9 : vector<8x1xf32>
    %18 = arith.subf %17, %16 : vector<8x1xf32>
    %c8_i32 = arith.constant 8 : i32
    %19 = arith.muli %arg0, %c8_i32 : i32
    %20 = tpu.iota {dimensions = array<i32: 0>} : vector<8x1xi32>
    %21 = vector.broadcast %19 : i32 to vector<8x1xi32>
    %22 = arith.addi %21, %20 : vector<8x1xi32>
    %c8_i32_6 = arith.constant 8 : i32
    %23 = vector.broadcast %c8_i32_6 : i32 to vector<8x1xi32>
    %24 = arith.cmpi slt, %22, %23 : vector<8x1xi32>
    %cst_7 = arith.constant 0.000000e+00 : f32
    %25 = vector.broadcast %cst_7 : f32 to vector<8x1xf32>
    %26 = arith.select %24, %18, %25 : vector<8x1xi1>, vector<8x1xf32>
    %27 = vector.shape_cast %26 : vector<8x1xf32> to vector<1x8x1xf32>
    %cst_8 = arith.constant dense<0.000000e+00> : vector<1xf32>
    %28 = vector.multi_reduction <add>, %27, %cst_8 [1, 2] : vector<1x8x1xf32> to vector<1xf32>
    %29 = vector.shape_cast %28 : vector<1xf32> to vector<1x1x1xf32>
    %30 = vector.extract %29[0, 0, 0] : f32 from vector<1x1x1xf32>
    %31 = vector.broadcast %30 : f32 to vector<1x8x128xf32>
    %c0_9 = arith.constant 0 : index
    %c0_10 = arith.constant 0 : index
    %c0_11 = arith.constant 0 : index
    %32 = vector.load %arg3[%c0_9, %c0_10, %c0_11] : memref<1x8x128xf32, #tpu.memory_space<vmem>>, vector<1x8x128xf32>
    tpu.vector_store %arg3[%c0_9, %c0_10, %c0_11], %31 {strides = array<i32>} : memref<1x8x128xf32, #tpu.memory_space<vmem>>, vector<1x8x128xf32>,
    return
  }
  func.func @transform_0(%arg0: i32) -> (i32, i32) {
    %c0_i32 = arith.constant 0 : i32
    %c0_i32_0 = arith.constant 0 : i32
    return %arg0, %c0_i32 : i32, i32
  }
  func.func @transform_1(%arg0: i32) -> (i32, i32) {
    %c0_i32 = arith.constant 0 : i32
    %c0_i32_0 = arith.constant 0 : i32
    return %arg0, %c0_i32 : i32, i32
  }
  func.func @transform_2(%arg0: i32) -> (i32, i32, i32) {
    %c0_i32 = arith.constant 0 : i32
    %c0_i32_0 = arith.constant 0 : i32
    %c0_i32_1 = arith.constant 0 : i32
    return %arg0, %c0_i32, %c0_i32_0 : i32, i32, i32
  }
}

</mosaic_0001>

<llo_original>
// kernel: tpu_custom_call.1
$region0: #{tpu_custom_call.1}
  #allocation0 [shape = 'u32[]', space=smem, size = 0x4, offset = 0x4, fixed_abs, tag = 'smem constant byte address 0x4 - core index']
  #allocation1 [shape = 'u32[72,128]{1,0:T(1,128)}', space=vmem, size = 0x9000, scoped, tag = 'internal scratch']
  %s0 = inlined_call_operand.vmem [shape: f32[8,32], index: 0, kind: input, shape index: {}]
  %s1 = inlined_call_operand.vmem [shape: s32[8,1], index: 1, kind: input, shape index: {}]
  %s2 = inlined_call_operand.hbm [shape: f32[1,8,128], index: 2, kind: output, shape index: {}]
  %s3 = sld [smem:[#allocation0]]
  $region18: #{tpu_custom_call.1} parent=0
    _
  %s5 = ssub.s32 1, %s3
  %s6 = scalar_select 0, %s5, %s3
  $region1: #{tpu_custom_call.1} parent=0
    #allocation2 [shape = 'u8[4096]{0}', space=vmem, size = 0x1000, scoped, tag = 'output window, operand 0, single buffered']
    #allocation3 [shape = 's32[1]{0}', space=sflag, size = 0x4, scoped, tag = 'scoped memory for tpu_custom_call.1']
    %7 = vsyncpa [#allocation3], 0
    // Predicated region
    $region2: #{tpu_custom_call.1} parent=1 // pred_check
      _
    $region3: #{tpu_custom_call.1} parent=1 // pred_check_branch
      %9 = sbr.rel (0) target = $region5
    $region4: #{tpu_custom_call.1} parent=1 // pred_region
      _
    $region5: #{tpu_custom_call.1} parent=1 // pred_fallthru
      _
    // Predicated region
    $region6: #{tpu_custom_call.1} parent=1 // pred_check
      _
    $region7: #{tpu_custom_call.1} parent=1 // pred_check_branch
      %11 = sbr.rel (0) target = $region9
    $region8: #{tpu_custom_call.1} parent=1 // pred_region
      _
    $region9: #{tpu_custom_call.1} parent=1 // pred_fallthru
      _
    %v12 = vld [vmem:[%s0] sm:$0xff]
    %v13 = vld [vmem:[%s1] sm:$0xff]
    %vm14 = vcmask 261120
    %v15 = vsel %vm14, %v12, -inf
    %16 = vmax.xlane.f32.xlu0 %v15
    %v17 = vpop.xlane.xlu0 %16
    %v18 = vsub.f32 %v12, %v17
    %v19 = vmul.f32 %v18, 1.442695
    %v20 = vpow.pop %v19
    %v21 = vsel %vm14, %v20, 0.0
    %22 = vadd.xlane.f32.xlu0 %v21
    %v23 = vpop.xlane.xlu0 %22
    %v24 = vlog2.pop %v23
    %v25 = vmul.f32 %v24, 0.6931472
    %v26 = vlaneseq
    %v27 = vand.u32 %v26, 127
    %28 = vset.pattern.permute.xlu0 0
    %29 = vperm.xlu0 %28, %v13
    %v30 = vpop.permute.xlu0 %29
    %vm31 = vcmp.eq.s32.totalorder %v27, %v30
    %v32 = vsel %vm31, %v12, 0.0
    %v33 = vsel %vm14, %v32, 0.0
    %34 = vadd.xlane.f32.xlu0 %v33
    %v35 = vpop.xlane.xlu0 %34
    %v36 = vadd.f32 %v17, %v25
    %v37 = vsub.f32 %v36, %v35
    %s38 = smul.u32 0, 8
    %v39 = vlaneseq
    %v40 = vshrl.u32 %v39, 7
    %v41 = vstv %s38
    %v42 = vadd.s32 %v41, %v40
    %vm43 = vcmp.lt.s32.totalorder %v42, 8
    %v44 = vsel %vm43, %v37, 0.0
    %vm45 = vcmask 7168
    %v46 = vsel %vm45, %v44, 0.0
    %47 = vadd.xlane.f32.xlu0 %v46
    %v48 = vpop.xlane.xlu0 %47
    %v49 = vrot.slane %v48, 4
    %v50 = vadd.f32 %v48, %v49
    %v51 = vrot.slane %v50, 2
    %v52 = vadd.f32 %v50, %v51
    %v53 = vrot.slane %v52, 1
    %v54 = vadd.f32 %v52, %v53
    %s55 = vtos %v54
    %v56 = vstv %s55
    %57 = vst [vmem:[#allocation2] sm:$0xff] %v56
    // Predicated region
    $region10: #{tpu_custom_call.1} parent=1 // pred_check
      _
    $region11: #{tpu_custom_call.1} parent=1 // pred_check_branch
      %59 = sbr.rel (0) target = $region13
    $region12: #{tpu_custom_call.1} parent=1 // pred_region
      %61 = vsyncadd [#allocation3], 0
      %s63 = sshll.u32 [#allocation2], 4
      %s64 = int_to_ptr.vmem [resolvable:$true] %s63
      %s65 = sshll.u32 %s2, 4
      %s66 = int_to_ptr.hbm [resolvable:$true] %s65
      %68 = dma.vmem_to_hbm [thread:$0]  %s64, 128, %s66, [#allocation3]
    $region13: #{tpu_custom_call.1} parent=1 // pred_fallthru
      _
    // Predicated region
    $region14: #{tpu_custom_call.1} parent=1 // pred_check
      _
    $region15: #{tpu_custom_call.1} parent=1 // pred_check_branch
      %70 = sbr.rel (0) target = $region17
    $region16: #{tpu_custom_call.1} parent=1 // pred_region
      %72 = dma.done [#allocation3], 128
    $region17: #{tpu_custom_call.1} parent=1 // pred_fallthru
      _
    %73 = vsyncpa [#allocation3], 1

</llo_original>
